<compile_context>
chip_gen: v6e
topology: v6e:2x2x1
jax: 0.10.0
libtpu: 0.0.40
codegen_flags: <defaults>
</compile_context>

<pallas_src>
import functools

import jax
import jax.numpy as jnp
from jax.experimental import pallas as pl
from jax.experimental.pallas import tpu as pltpu

LANE = 128   # TPU vreg lane width; every layer's out-dim is padded to this
H0 = 128     # fc0 out features (already lane-dense)
H1 = 64      # fc1 out features (zero-padded to LANE in packed params)


def _round_up(n, m):
    return (n + m - 1) // m * m


def ddpg_actor_kernel(x_ref, w0_ref, b0_ref, w1_ref, b1_ref, w2_ref, b2_ref,
                      out_ref):
    """Fused 3-layer MLP: relu(xW0+b0) -> relu(.W1+b1) -> tanh(.W2+b2).

    Weights are bf16 (half the DMA, native MXU path); biases and the
    elementwise epilogue stay f32. All layer widths are 128 lanes so the
    output store is unmasked and lane-dense.
    """
    # layer 0: (TB, S) @ (S, 128) -> relu
    h0 = jnp.dot(x_ref[...], w0_ref[...], preferred_element_type=jnp.float32)
    h0 = jnp.maximum(h0 + b0_ref[...], 0.0)

    # layer 1: (TB, 128) @ (128, 128) -> relu   (hidden-64 zero-padded to 128)
    h1 = jnp.dot(h0.astype(jnp.bfloat16), w1_ref[...],
                 preferred_element_type=jnp.float32)
    h1 = jnp.maximum(h1 + b1_ref[...], 0.0)

    # layer 2: (TB, 128) @ (128, 128) -> tanh   (action_dim zero-padded to 128)
    h2 = jnp.dot(h1.astype(jnp.bfloat16), w2_ref[...],
                 preferred_element_type=jnp.float32)
    out_ref[...] = jnp.tanh(h2 + b2_ref[...]).astype(out_ref.dtype)


def init_params(key, state_dim, action_dim):
    """nn.Linear-style init; weights stored [in, out] so the kernel does x @ W."""
    ks = jax.random.split(key, 6)

    def uniform(k, shape, fan_in):
        bound = 1.0 / jnp.sqrt(fan_in)
        return jax.random.uniform(k, shape, jnp.float32, -bound, bound)

    return {
        "w0": uniform(ks[0], (state_dim, H0), state_dim),
        "b0": uniform(ks[1], (H0,), state_dim),
        "w1": uniform(ks[2], (H0, H1), H0),
        "b1": uniform(ks[3], (H1,), H0),
        "w2": uniform(ks[4], (H1, action_dim), H1),
        "b2": uniform(ks[5], (action_dim,), H1),
    }


def pack_params(p):
    """Zero-pad every out-dim (and fc2's in-dim) to 128 lanes; weights -> bf16.

    Padded fc1 columns stay exactly zero through ReLU and the padded fc2 rows
    multiply those zeros, so the math is unchanged. Biases kept f32 as (1, N)
    rows for clean broadcasting.
    """
    a = p["w2"].shape[1]
    w1p = jnp.zeros((H0, LANE), jnp.float32).at[:, :H1].set(p["w1"])
    b1p = jnp.zeros((LANE,), jnp.float32).at[:H1].set(p["b1"])
    w2p = jnp.zeros((LANE, LANE), jnp.float32).at[:H1, :a].set(p["w2"])
    b2p = jnp.zeros((LANE,), jnp.float32).at[:a].set(p["b2"])
    return {
        "w0": p["w0"].astype(jnp.bfloat16),
        "b0": p["b0"].reshape(1, H0).astype(jnp.float32),
        "w1": w1p.astype(jnp.bfloat16),
        "b1": b1p.reshape(1, LANE),
        "w2": w2p.astype(jnp.bfloat16),
        "b2": b2p.reshape(1, LANE),
    }


@functools.partial(jax.jit, static_argnames=("action_dim", "block_batch"))
def ddpg_actor_forward(x, params, *, action_dim, block_batch=512):
    """x: [B, state_dim] f32; params: output of pack_params. Returns [B, action_dim] f32."""
    w0, b0 = params["w0"], params["b0"]
    w1, b1 = params["w1"], params["b1"]
    w2, b2 = params["w2"], params["b2"]

    batch, state_dim = x.shape

    # Batch tile: one tile for small batches, 512-row tiles otherwise
    # (sized for v7x's 64 MiB VMEM with double-buffered x/out tiles).
    tb = _round_up(min(block_batch, _round_up(batch, 8)), 8)
    batch_pad = _round_up(batch, tb)
    if batch_pad != batch:
        x = jnp.pad(x, ((0, batch_pad - batch), (0, 0)))
    x = x.astype(jnp.bfloat16)

    grid = (batch_pad // tb,)

    flops = 2 * batch_pad * (state_dim * H0 + H0 * LANE + LANE * LANE)
    bytes_accessed = (
        x.size * 2                                    # bf16 input
        + (w0.size + w1.size + w2.size) * 2           # bf16 weights
        + (b0.size + b1.size + b2.size) * 4           # f32 biases
        + batch_pad * LANE * 4)                       # f32 output

    out = pl.pallas_call(
        ddpg_actor_kernel,
        out_shape=jax.ShapeDtypeStruct((batch_pad, LANE), jnp.float32),
        grid=grid,
        in_specs=[
            pl.BlockSpec((tb, state_dim), lambda i: (i, 0)),   # x tile
            pl.BlockSpec(w0.shape, lambda i: (0, 0)),          # weights stay
            pl.BlockSpec(b0.shape, lambda i: (0, 0)),          # VMEM-resident
            pl.BlockSpec(w1.shape, lambda i: (0, 0)),          # across grid
            pl.BlockSpec(b1.shape, lambda i: (0, 0)),           # iterations
            pl.BlockSpec(w2.shape, lambda i: (0, 0)),
            pl.BlockSpec(b2.shape, lambda i: (0, 0)),
        ],
        out_specs=pl.BlockSpec((tb, LANE), lambda i: (i, 0)),
        compiler_params=pltpu.CompilerParams(
            dimension_semantics=("parallel",)),
        cost_estimate=pl.CostEstimate(
            flops=flops,
            transcendentals=batch_pad * LANE,
            bytes_accessed=bytes_accessed),
    )(x, w0, b0, w1, b1, w2, b2)

    return out[:batch, :action_dim]


def reference_forward(x, p_f32):
    """Pure-JAX reference in the kernel's precision (bf16 matmul inputs,
    f32 accumulation, f32 epilogue)."""
    def mm(a, w):
        return jnp.dot(a.astype(jnp.bfloat16), w.astype(jnp.bfloat16),
                       preferred_element_type=jnp.float32)
    h0 = jnp.maximum(mm(x, p_f32["w0"]) + p_f32["b0"], 0.0)
    h1 = jnp.maximum(mm(h0, p_f32["w1"]) + p_f32["b1"], 0.0)
    return jnp.tanh(mm(h1, p_f32["w2"]) + p_f32["b2"])


if __name__ == "__main__":
    batch = 8
    state_dim = 16     # DDPGActor(state_dim=(16,), action_dim=8)
    action_dim = 8

    key = jax.random.PRNGKey(0)
    k_params, k_x = jax.random.split(key)

    params_f32 = init_params(k_params, state_dim, action_dim)
    packed = pack_params(params_f32)

    # Small-batch path (single grid step).
    x = jax.random.normal(k_x, (batch, state_dim), dtype=jnp.float32)
    out = jax.block_until_ready(
        ddpg_actor_forward(x, packed, action_dim=action_dim))
    ref = reference_forward(x, params_f32)
    assert out.shape == (batch, action_dim)
    assert jnp.allclose(out, ref, atol=1e-3, rtol=1e-3), (
        f"small-batch mismatch: max|err|={jnp.max(jnp.abs(out - ref))}")

    # Larger batch: exercises the batch grid, padding, and tile slicing.
    big_b = 1030  # not a multiple of the 512-row tile -> padded, 3 grid steps
    xb = jax.random.normal(jax.random.PRNGKey(1), (big_b, state_dim),
                           dtype=jnp.float32)
    ob = jax.block_until_ready(
        ddpg_actor_forward(xb, packed, action_dim=action_dim))
    rb = reference_forward(xb, params_f32)
    assert ob.shape == (big_b, action_dim)
    assert jnp.allclose(ob, rb, atol=1e-3, rtol=1e-3), (
        f"batched mismatch: max|err|={jnp.max(jnp.abs(ob - rb))}")

    print("KERNEL_OK")
</pallas_src>

<mosaic_0001>
module attributes {stable_mosaic.version = 11 : i64} {
  func.func @ddpg_actor_kernel(%arg0: i32, %arg1: memref<8x16xbf16, #tpu.memory_space<vmem>>, %arg2: memref<16x128xbf16, #tpu.memory_space<vmem>>, %arg3: memref<1x128xf32, #tpu.memory_space<vmem>>, %arg4: memref<128x128xbf16, #tpu.memory_space<vmem>>, %arg5: memref<1x128xf32, #tpu.memory_space<vmem>>, %arg6: memref<128x128xbf16, #tpu.memory_space<vmem>>, %arg7: memref<1x128xf32, #tpu.memory_space<vmem>>, %arg8: memref<8x128xf32, #tpu.memory_space<vmem>>) attributes {dimension_semantics = [#tpu.dimension_semantics<parallel>], iteration_bounds = array<i64: 1>, scalar_prefetch = 0 : i64, scratch_operands = 0 : i64, tpu.core_type = #tpu.core_type<tc>, window_params = [{transform_indices = @transform_0, window_bounds = array<i64: 8, 16>}, {pipeline_mode = #tpu.pipeline_mode<synchronous>, transform_indices = @transform_1, window_bounds = array<i64: 16, 128>}, {pipeline_mode = #tpu.pipeline_mode<synchronous>, transform_indices = @transform_2, window_bounds = array<i64: 1, 128>}, {pipeline_mode = #tpu.pipeline_mode<synchronous>, transform_indices = @transform_3, window_bounds = array<i64: 128, 128>}, {pipeline_mode = #tpu.pipeline_mode<synchronous>, transform_indices = @transform_4, window_bounds = array<i64: 1, 128>}, {pipeline_mode = #tpu.pipeline_mode<synchronous>, transform_indices = @transform_5, window_bounds = array<i64: 128, 128>}, {pipeline_mode = #tpu.pipeline_mode<synchronous>, transform_indices = @transform_6, window_bounds = array<i64: 1, 128>}, {transform_indices = @transform_7, window_bounds = array<i64: 8, 128>}]} {
    %c0 = arith.constant 0 : index
    %c0_0 = arith.constant 0 : index
    %0 = vector.load %arg1[%c0, %c0_0] : memref<8x16xbf16, #tpu.memory_space<vmem>>, vector<8x16xbf16>
    %c0_1 = arith.constant 0 : index
    %c0_2 = arith.constant 0 : index
    %1 = vector.load %arg2[%c0_1, %c0_2] : memref<16x128xbf16, #tpu.memory_space<vmem>>, vector<16x128xbf16>
    %cst = arith.constant dense<0.000000e+00> : vector<8x128xf32>
    %2 = tpu.matmul %0, %1, %cst {dimension_numbers = #tpu.dot_dimension_numbers<[1], [0], [0], [1], [0, 0, 1, 1], [], []>} : vector<8x16xbf16>, vector<16x128xbf16>, vector<8x128xf32> -> vector<8x128xf32>
    %c0_3 = arith.constant 0 : index
    %c0_4 = arith.constant 0 : index
    %3 = vector.load %arg3[%c0_3, %c0_4] : memref<1x128xf32, #tpu.memory_space<vmem>>, vector<1x128xf32>
    %4 = vector.broadcast %3 : vector<1x128xf32> to vector<8x128xf32>
    %5 = arith.addf %2, %4 : vector<8x128xf32>
    %cst_5 = arith.constant 0.000000e+00 : f32
    %6 = vector.broadcast %cst_5 : f32 to vector<8x128xf32>
    %7 = arith.maximumf %5, %6 : vector<8x128xf32>
    %8 = arith.truncf %7 : vector<8x128xf32> to vector<8x128xbf16>
    %c0_6 = arith.constant 0 : index
    %c0_7 = arith.constant 0 : index
    %9 = vector.load %arg4[%c0_6, %c0_7] : memref<128x128xbf16, #tpu.memory_space<vmem>>, vector<128x128xbf16>
    %cst_8 = arith.constant dense<0.000000e+00> : vector<8x128xf32>
    %10 = tpu.matmul %8, %9, %cst_8 {dimension_numbers = #tpu.dot_dimension_numbers<[1], [0], [0], [1], [0, 0, 1, 1], [], []>} : vector<8x128xbf16>, vector<128x128xbf16>, vector<8x128xf32> -> vector<8x128xf32>
    %c0_9 = arith.constant 0 : index
    %c0_10 = arith.constant 0 : index
    %11 = vector.load %arg5[%c0_9, %c0_10] : memref<1x128xf32, #tpu.memory_space<vmem>>, vector<1x128xf32>
    %12 = vector.broadcast %11 : vector<1x128xf32> to vector<8x128xf32>
    %13 = arith.addf %10, %12 : vector<8x128xf32>
    %cst_11 = arith.constant 0.000000e+00 : f32
    %14 = vector.broadcast %cst_11 : f32 to vector<8x128xf32>
    %15 = arith.maximumf %13, %14 : vector<8x128xf32>
    %16 = arith.truncf %15 : vector<8x128xf32> to vector<8x128xbf16>
    %c0_12 = arith.constant 0 : index
    %c0_13 = arith.constant 0 : index
    %17 = vector.load %arg6[%c0_12, %c0_13] : memref<128x128xbf16, #tpu.memory_space<vmem>>, vector<128x128xbf16>
    %cst_14 = arith.constant dense<0.000000e+00> : vector<8x128xf32>
    %18 = tpu.matmul %16, %17, %cst_14 {dimension_numbers = #tpu.dot_dimension_numbers<[1], [0], [0], [1], [0, 0, 1, 1], [], []>} : vector<8x128xbf16>, vector<128x128xbf16>, vector<8x128xf32> -> vector<8x128xf32>
    %c0_15 = arith.constant 0 : index
    %c0_16 = arith.constant 0 : index
    %19 = vector.load %arg7[%c0_15, %c0_16] : memref<1x128xf32, #tpu.memory_space<vmem>>, vector<1x128xf32>
    %20 = vector.broadcast %19 : vector<1x128xf32> to vector<8x128xf32>
    %21 = arith.addf %18, %20 : vector<8x128xf32>
    %22 = math.tanh %21 : vector<8x128xf32>
    %c0_17 = arith.constant 0 : index
    %c0_18 = arith.constant 0 : index
    %23 = vector.load %arg8[%c0_17, %c0_18] : memref<8x128xf32, #tpu.memory_space<vmem>>, vector<8x128xf32>
    tpu.vector_store %arg8[%c0_17, %c0_18], %22 {strides = array<i32>} : memref<8x128xf32, #tpu.memory_space<vmem>>, vector<8x128xf32>,
    return
  }
  func.func @transform_0(%arg0: i32) -> (i32, i32) {
    %c0_i32 = arith.constant 0 : i32
    %c0_i32_0 = arith.constant 0 : i32
    return %arg0, %c0_i32 : i32, i32
  }
  func.func @transform_1(%arg0: i32) -> (i32, i32) {
    %c0_i32 = arith.constant 0 : i32
    %c0_i32_0 = arith.constant 0 : i32
    %c0_i32_1 = arith.constant 0 : i32
    return %c0_i32, %c0_i32_0 : i32, i32
  }
  func.func @transform_2(%arg0: i32) -> (i32, i32) {
    %c0_i32 = arith.constant 0 : i32
    %c0_i32_0 = arith.constant 0 : i32
    %c0_i32_1 = arith.constant 0 : i32
    return %c0_i32, %c0_i32_0 : i32, i32
  }
  func.func @transform_3(%arg0: i32) -> (i32, i32) {
    %c0_i32 = arith.constant 0 : i32
    %c0_i32_0 = arith.constant 0 : i32
    %c0_i32_1 = arith.constant 0 : i32
    return %c0_i32, %c0_i32_0 : i32, i32
  }
  func.func @transform_4(%arg0: i32) -> (i32, i32) {
    %c0_i32 = arith.constant 0 : i32
    %c0_i32_0 = arith.constant 0 : i32
    %c0_i32_1 = arith.constant 0 : i32
    return %c0_i32, %c0_i32_0 : i32, i32
  }
  func.func @transform_5(%arg0: i32) -> (i32, i32) {
    %c0_i32 = arith.constant 0 : i32
    %c0_i32_0 = arith.constant 0 : i32
    %c0_i32_1 = arith.constant 0 : i32
    return %c0_i32, %c0_i32_0 : i32, i32
  }
  func.func @transform_6(%arg0: i32) -> (i32, i32) {
    %c0_i32 = arith.constant 0 : i32
    %c0_i32_0 = arith.constant 0 : i32
    %c0_i32_1 = arith.constant 0 : i32
    return %c0_i32, %c0_i32_0 : i32, i32
  }
  func.func @transform_7(%arg0: i32) -> (i32, i32) {
    %c0_i32 = arith.constant 0 : i32
    %c0_i32_0 = arith.constant 0 : i32
    return %arg0, %c0_i32 : i32, i32
  }
}

</mosaic_0001>

<llo_original>
// kernel: ddpg_actor_forward.1
$region0: #{ddpg_actor_forward.1}
  #allocation0 [shape = 'u32[]', space=smem, size = 0x4, offset = 0x4, fixed_abs, tag = 'smem constant byte address 0x4 - core index']
  #allocation1 [shape = 'u32[144,128]{1,0:T(1,128)}', space=vmem, size = 0x12000, scoped, tag = 'internal scratch']
  %s0 = inlined_call_operand.vmem [shape: bf16[8,16], index: 0, kind: input, shape index: {}]
  %s1 = inlined_call_operand.vmem [shape: bf16[16,128], index: 1, kind: input, shape index: {}]
  %s2 = inlined_call_operand.vmem [shape: f32[1,128], index: 2, kind: input, shape index: {}]
  %s3 = inlined_call_operand.hbm [shape: bf16[128,128], index: 3, kind: input, shape index: {}]
  %s4 = inlined_call_operand.vmem [shape: f32[1,128], index: 4, kind: input, shape index: {}]
  %s5 = inlined_call_operand.hbm [shape: bf16[128,128], index: 5, kind: input, shape index: {}]
  %s6 = inlined_call_operand.vmem [shape: f32[1,128], index: 6, kind: input, shape index: {}]
  %s7 = inlined_call_operand.hbm [shape: f32[8,128], index: 7, kind: output, shape index: {}]
  %s8 = sld [smem:[#allocation0]]
  $region46: #{ddpg_actor_forward.1} parent=0
    _
  %s10 = ssub.s32 1, %s8
  %s11 = scalar_select 0, %s10, %s8
  $region1: #{ddpg_actor_forward.1} parent=0
    #allocation2 [shape = 'u8[32768]{0}', space=vmem, size = 0x8000, scoped, tag = 'input window, operand 3, single buffered']
    #allocation3 [shape = 's32[1]{0}', space=sflag, size = 0x4, scoped, tag = 'scoped memory for ddpg_actor_forward.1']
    #allocation4 [shape = 's32[1]{0}', space=sflag, size = 0x4, scoped, tag = 'scoped memory for ddpg_actor_forward.1']
    #allocation5 [shape = 'u8[32768]{0}', space=vmem, size = 0x8000, scoped, tag = 'input window, operand 5, single buffered']
    #allocation6 [shape = 's32[1]{0}', space=sflag, size = 0x4, scoped, tag = 'scoped memory for ddpg_actor_forward.1']
    #allocation7 [shape = 'u8[4096]{0}', space=vmem, size = 0x1000, scoped, tag = 'output window, operand 0, single buffered']
    %12 = vsyncpa [#allocation3], 0
    %13 = vsyncpa [#allocation6], 0
    %14 = vsyncpa [#allocation4], 0
    // Predicated region
    $region2: #{ddpg_actor_forward.1} parent=1 // pred_check
      _
    $region3: #{ddpg_actor_forward.1} parent=1 // pred_check_branch
      %16 = sbr.rel (0) target = $region5
    $region4: #{ddpg_actor_forward.1} parent=1 // pred_region
      _
    $region5: #{ddpg_actor_forward.1} parent=1 // pred_fallthru
      _
    // Predicated region
    $region6: #{ddpg_actor_forward.1} parent=1 // pred_check
      _
    $region7: #{ddpg_actor_forward.1} parent=1 // pred_check_branch
      %18 = sbr.rel (0) target = $region9
    $region8: #{ddpg_actor_forward.1} parent=1 // pred_region
      _
    $region9: #{ddpg_actor_forward.1} parent=1 // pred_fallthru
      _
    // Predicated region
    $region10: #{ddpg_actor_forward.1} parent=1 // pred_check
      _
    $region11: #{ddpg_actor_forward.1} parent=1 // pred_check_branch
      %20 = sbr.rel (0) target = $region13
    $region12: #{ddpg_actor_forward.1} parent=1 // pred_region
      _
    $region13: #{ddpg_actor_forward.1} parent=1 // pred_fallthru
      _
    // Predicated region
    $region14: #{ddpg_actor_forward.1} parent=1 // pred_check
      _
    $region15: #{ddpg_actor_forward.1} parent=1 // pred_check_branch
      %22 = sbr.rel (0) target = $region17
    $region16: #{ddpg_actor_forward.1} parent=1 // pred_region
      %s24 = ssub.s32 1024, 1024
      %25 = vsyncadd [#allocation3], %s24
      %s26 = sshll.u32 [#allocation2], 4
      %s27 = int_to_ptr.vmem [resolvable:$true] %s26
      %32 = dma.hbm_to_vmem [thread:$0]  %s3, 1024, %s27, [#allocation3], 64, 64, 4
    $region17: #{ddpg_actor_forward.1} parent=1 // pred_fallthru
      _
    // Predicated region
    $region18: #{ddpg_actor_forward.1} parent=1 // pred_check
      _
    $region19: #{ddpg_actor_forward.1} parent=1 // pred_check_branch
      %34 = sbr.rel (0) target = $region21
    $region20: #{ddpg_actor_forward.1} parent=1 // pred_region
      _
    $region21: #{ddpg_actor_forward.1} parent=1 // pred_fallthru
      _
    // Predicated region
    $region22: #{ddpg_actor_forward.1} parent=1 // pred_check
      _
    $region23: #{ddpg_actor_forward.1} parent=1 // pred_check_branch
      %36 = sbr.rel (0) target = $region25
    $region24: #{ddpg_actor_forward.1} parent=1 // pred_region
      %s38 = ssub.s32 1024, 1024
      %39 = vsyncadd [#allocation6], %s38
      %s40 = sshll.u32 [#allocation5], 4
      %s41 = int_to_ptr.vmem [resolvable:$true] %s40
      %46 = dma.hbm_to_vmem [thread:$0]  %s5, 1024, %s41, [#allocation6], 64, 64, 4
    $region25: #{ddpg_actor_forward.1} parent=1 // pred_fallthru
      _
    // Predicated region
    $region26: #{ddpg_actor_forward.1} parent=1 // pred_check
      _
    $region27: #{ddpg_actor_forward.1} parent=1 // pred_check_branch
      %48 = sbr.rel (0) target = $region29
    $region28: #{ddpg_actor_forward.1} parent=1 // pred_region
      _
    $region29: #{ddpg_actor_forward.1} parent=1 // pred_fallthru
      _
    // Predicated region
    $region30: #{ddpg_actor_forward.1} parent=1 // pred_check
      _
    $region31: #{ddpg_actor_forward.1} parent=1 // pred_check_branch
      %50 = sbr.rel (0) target = $region33
    $region32: #{ddpg_actor_forward.1} parent=1 // pred_region
      %51 = dma.done [#allocation3], 1024
    $region33: #{ddpg_actor_forward.1} parent=1 // pred_fallthru
      _
    // Predicated region
    $region34: #{ddpg_actor_forward.1} parent=1 // pred_check
      _
    $region35: #{ddpg_actor_forward.1} parent=1 // pred_check_branch
      %53 = sbr.rel (0) target = $region37
    $region36: #{ddpg_actor_forward.1} parent=1 // pred_region
      %54 = dma.done [#allocation6], 1024
    $region37: #{ddpg_actor_forward.1} parent=1 // pred_fallthru
      _
    %v56 = vld [vmem:[%s0] sm:$0xf]
    %v57 = vld [vmem:[%s1] sm:$0xf]
    %v58 = vld [vmem:[%s1 + $0x4] sm:$0xf]
    %v59 = vld [vmem:[%s2] sm:$0x1]
    %v61 = vlaneseq
    %v62 = vshrl.u32 %v61, 7
    %v63 = vsub.s32 0, %v62
    %v64 = vrot.slane %v59, %v63
    %v68 = vunpack.c.l.b16 %v57
    %v69 = vunpack.c.l.b16 %v58
    %v70 = vpack.c.b16 %v69, %v68
    %vm72 = vcmask 130048
    %v74 = vsel %vm72, %v56, 0
    %76 = vmatprep.subr.bf16.mxu0 0
    %77 = vmatpush1.bf16.msra.mxu0 0
    %78 = vmatprep.subr.bf16.mxu0 0
    %79 = vmatpush1.bf16.msra.mxu0 0
    %80 = vmatprep.subr.bf16.mxu0 0
    %81 = vmatpush1.bf16.msra.mxu0 0
    %82 = vmatprep.subr.bf16.mxu0 0
    %83 = vmatpush1.bf16.msra.mxu0 0
    %84 = vmatprep.subr.bf16.mxu0 0
    %85 = vmatpush1.bf16.msra.mxu0 0
    %86 = vmatprep.subr.bf16.mxu0 0
    %87 = vmatpush1.bf16.msra.mxu0 0
    %88 = vmatprep.subr.bf16.mxu0 0
    %89 = vmatpush1.bf16.msra.mxu0 0
    %90 = vmatprep.subr.bf16.mxu0 0
    %91 = vmatpush1.bf16.msra.mxu0 %v70
    %92 = vmatprep.subr.bf16.mxu0 0
    %93 = vmatpush2.bf16.msra.mxu0 0
    %94 = vmatprep.subr.bf16.mxu0 0
    %95 = vmatpush2.bf16.msra.mxu0 0
    %96 = vmatprep.subr.bf16.mxu0 0
    %97 = vmatpush2.bf16.msra.mxu0 0
    %98 = vmatprep.subr.bf16.mxu0 0
    %99 = vmatpush2.bf16.msra.mxu0 0
    %100 = vmatprep.subr.bf16.mxu0 0
    %101 = vmatpush2.bf16.msra.mxu0 0
    %102 = vmatprep.subr.bf16.mxu0 0
    %103 = vmatpush2.bf16.msra.mxu0 0
    %104 = vmatprep.subr.bf16.mxu0 0
    %105 = vmatpush2.bf16.msra.mxu0 0
    %106 = vmatprep.subr.bf16.mxu0 0
    %107 = vmatpush2.bf16.msra.mxu0 0
    %108 = vmatprep.mubr.bf16.mxu0 0
    %109 = vmatmul.mubr.bf16.gmra.mxu0 %v74
    %v110 = vpop.f32.mrf.mxu0
    %v111 = vadd.f32 %v64, %v110
    %v112 = vpop.f32.mrf.mxu0
    %v113 = vpop.f32.mrf.mxu0
    %v114 = vpop.f32.mrf.mxu0
    %115 = vdwg.mxu0
    %v116 = vmax.f32 %v111, 0.0
    %v117 = vpack.c.bf16 %v116, %v116
    %v118 = vld [vmem:[#allocation2] sm:$0xf]
    %v119 = vld [vmem:[#allocation2 + $0x4] sm:$0xf]
    %v120 = vld [vmem:[#allocation2 + $0x8] sm:$0xf]
    %v121 = vld [vmem:[#allocation2 + $0xc] sm:$0xf]
    %v122 = vld [vmem:[#allocation2 + $0x10] sm:$0xf]
    %v123 = vld [vmem:[#allocation2 + $0x14] sm:$0xf]
    %v124 = vld [vmem:[#allocation2 + $0x18] sm:$0xf]
    %v125 = vld [vmem:[#allocation2 + $0x1c] sm:$0xf]
    %v126 = vld [vmem:[#allocation2 + $0x20] sm:$0xf]
    %v127 = vld [vmem:[#allocation2 + $0x24] sm:$0xf]
    %v128 = vld [vmem:[#allocation2 + $0x28] sm:$0xf]
    %v129 = vld [vmem:[#allocation2 + $0x2c] sm:$0xf]
    %v130 = vld [vmem:[#allocation2 + $0x30] sm:$0xf]
    %v131 = vld [vmem:[#allocation2 + $0x34] sm:$0xf]
    %v132 = vld [vmem:[#allocation2 + $0x38] sm:$0xf]
    %v133 = vld [vmem:[#allocation2 + $0x3c] sm:$0xf]
    %v134 = vld [vmem:[%s4] sm:$0x1]
    %v136 = vlaneseq
    %v137 = vshrl.u32 %v136, 7
    %v138 = vsub.s32 0, %v137
    %v139 = vrot.slane %v134, %v138
    %v157 = vunpack.c.l.b16 %v118
    %v158 = vunpack.c.l.b16 %v119
    %v159 = vunpack.c.l.b16 %v120
    %v160 = vunpack.c.l.b16 %v121
    %v161 = vunpack.c.l.b16 %v122
    %v162 = vunpack.c.l.b16 %v123
    %v163 = vunpack.c.l.b16 %v124
    %v164 = vunpack.c.l.b16 %v125
    %v165 = vunpack.c.l.b16 %v126
    %v166 = vunpack.c.l.b16 %v127
    %v167 = vunpack.c.l.b16 %v128
    %v168 = vunpack.c.l.b16 %v129
    %v169 = vunpack.c.l.b16 %v130
    %v170 = vunpack.c.l.b16 %v131
    %v171 = vunpack.c.l.b16 %v132
    %v172 = vunpack.c.l.b16 %v133
    %v173 = vpack.c.b16 %v158, %v157
    %v174 = vpack.c.b16 %v160, %v159
    %v175 = vpack.c.b16 %v162, %v161
    %v176 = vpack.c.b16 %v164, %v163
    %v177 = vpack.c.b16 %v166, %v165
    %v178 = vpack.c.b16 %v168, %v167
    %v179 = vpack.c.b16 %v170, %v169
    %v180 = vpack.c.b16 %v172, %v171
    %189 = vmatprep.subr.bf16.mxu0 0
    %190 = vmatpush1.bf16.msra.mxu0 %v180
    %191 = vmatprep.subr.bf16.mxu0 0
    %192 = vmatpush1.bf16.msra.mxu0 %v179
    %193 = vmatprep.subr.bf16.mxu0 0
    %194 = vmatpush1.bf16.msra.mxu0 %v178
    %195 = vmatprep.subr.bf16.mxu0 0
    %196 = vmatpush1.bf16.msra.mxu0 %v177
    %197 = vmatprep.subr.bf16.mxu0 0
    %198 = vmatpush1.bf16.msra.mxu0 %v176
    %199 = vmatprep.subr.bf16.mxu0 0
    %200 = vmatpush1.bf16.msra.mxu0 %v175
    %201 = vmatprep.subr.bf16.mxu0 0
    %202 = vmatpush1.bf16.msra.mxu0 %v174
    %203 = vmatprep.subr.bf16.mxu0 0
    %204 = vmatpush1.bf16.msra.mxu0 %v173
    %205 = vmatprep.subr.bf16.mxu0 0
    %206 = vmatpush2.bf16.msra.mxu0 0
    %207 = vmatprep.subr.bf16.mxu0 0
    %208 = vmatpush2.bf16.msra.mxu0 0
    %209 = vmatprep.subr.bf16.mxu0 0
    %210 = vmatpush2.bf16.msra.mxu0 0
    %211 = vmatprep.subr.bf16.mxu0 0
    %212 = vmatpush2.bf16.msra.mxu0 0
    %213 = vmatprep.subr.bf16.mxu0 0
    %214 = vmatpush2.bf16.msra.mxu0 0
    %215 = vmatprep.subr.bf16.mxu0 0
    %216 = vmatpush2.bf16.msra.mxu0 0
    %217 = vmatprep.subr.bf16.mxu0 0
    %218 = vmatpush2.bf16.msra.mxu0 0
    %219 = vmatprep.subr.bf16.mxu0 0
    %220 = vmatpush2.bf16.msra.mxu0 0
    %221 = vmatprep.mubr.bf16.mxu0 0
    %222 = vmatmul.mubr.bf16.gmra.mxu0 %v117
    %v223 = vpop.f32.mrf.mxu0
    %v224 = vadd.f32 %v139, %v223
    %v225 = vpop.f32.mrf.mxu0
    %v226 = vpop.f32.mrf.mxu0
    %v227 = vpop.f32.mrf.mxu0
    %228 = vdwg.mxu0
    %v229 = vmax.f32 %v224, 0.0
    %v230 = vpack.c.bf16 %v229, %v229
    %v231 = vld [vmem:[#allocation5] sm:$0xf]
    %v232 = vld [vmem:[#allocation5 + $0x4] sm:$0xf]
    %v233 = vld [vmem:[#allocation5 + $0x8] sm:$0xf]
    %v234 = vld [vmem:[#allocation5 + $0xc] sm:$0xf]
    %v235 = vld [vmem:[#allocation5 + $0x10] sm:$0xf]
    %v236 = vld [vmem:[#allocation5 + $0x14] sm:$0xf]
    %v237 = vld [vmem:[#allocation5 + $0x18] sm:$0xf]
    %v238 = vld [vmem:[#allocation5 + $0x1c] sm:$0xf]
    %v239 = vld [vmem:[#allocation5 + $0x20] sm:$0xf]
    %v240 = vld [vmem:[#allocation5 + $0x24] sm:$0xf]
    %v241 = vld [vmem:[#allocation5 + $0x28] sm:$0xf]
    %v242 = vld [vmem:[#allocation5 + $0x2c] sm:$0xf]
    %v243 = vld [vmem:[#allocation5 + $0x30] sm:$0xf]
    %v244 = vld [vmem:[#allocation5 + $0x34] sm:$0xf]
    %v245 = vld [vmem:[#allocation5 + $0x38] sm:$0xf]
    %v246 = vld [vmem:[#allocation5 + $0x3c] sm:$0xf]
    %v247 = vld [vmem:[%s6] sm:$0x1]
    %v249 = vlaneseq
    %v250 = vshrl.u32 %v249, 7
    %v251 = vsub.s32 0, %v250
    %v252 = vrot.slane %v247, %v251
    %v270 = vunpack.c.l.b16 %v231
    %v271 = vunpack.c.l.b16 %v232
    %v272 = vunpack.c.l.b16 %v233
    %v273 = vunpack.c.l.b16 %v234
    %v274 = vunpack.c.l.b16 %v235
    %v275 = vunpack.c.l.b16 %v236
    %v276 = vunpack.c.l.b16 %v237
    %v277 = vunpack.c.l.b16 %v238
    %v278 = vunpack.c.l.b16 %v239
    %v279 = vunpack.c.l.b16 %v240
    %v280 = vunpack.c.l.b16 %v241
    %v281 = vunpack.c.l.b16 %v242
    %v282 = vunpack.c.l.b16 %v243
    %v283 = vunpack.c.l.b16 %v244
    %v284 = vunpack.c.l.b16 %v245
    %v285 = vunpack.c.l.b16 %v246
    %v286 = vpack.c.b16 %v271, %v270
    %v287 = vpack.c.b16 %v273, %v272
    %v288 = vpack.c.b16 %v275, %v274
    %v289 = vpack.c.b16 %v277, %v276
    %v290 = vpack.c.b16 %v279, %v278
    %v291 = vpack.c.b16 %v281, %v280
    %v292 = vpack.c.b16 %v283, %v282
    %v293 = vpack.c.b16 %v285, %v284
    %302 = vmatprep.subr.bf16.mxu0 0
    %303 = vmatpush1.bf16.msra.mxu0 %v293
    %304 = vmatprep.subr.bf16.mxu0 0
    %305 = vmatpush1.bf16.msra.mxu0 %v292
    %306 = vmatprep.subr.bf16.mxu0 0
    %307 = vmatpush1.bf16.msra.mxu0 %v291
    %308 = vmatprep.subr.bf16.mxu0 0
    %309 = vmatpush1.bf16.msra.mxu0 %v290
    %310 = vmatprep.subr.bf16.mxu0 0
    %311 = vmatpush1.bf16.msra.mxu0 %v289
    %312 = vmatprep.subr.bf16.mxu0 0
    %313 = vmatpush1.bf16.msra.mxu0 %v288
    %314 = vmatprep.subr.bf16.mxu0 0
    %315 = vmatpush1.bf16.msra.mxu0 %v287
    %316 = vmatprep.subr.bf16.mxu0 0
    %317 = vmatpush1.bf16.msra.mxu0 %v286
    %318 = vmatprep.subr.bf16.mxu0 0
    %319 = vmatpush2.bf16.msra.mxu0 0
    %320 = vmatprep.subr.bf16.mxu0 0
    %321 = vmatpush2.bf16.msra.mxu0 0
    %322 = vmatprep.subr.bf16.mxu0 0
    %323 = vmatpush2.bf16.msra.mxu0 0
    %324 = vmatprep.subr.bf16.mxu0 0
    %325 = vmatpush2.bf16.msra.mxu0 0
    %326 = vmatprep.subr.bf16.mxu0 0
    %327 = vmatpush2.bf16.msra.mxu0 0
    %328 = vmatprep.subr.bf16.mxu0 0
    %329 = vmatpush2.bf16.msra.mxu0 0
    %330 = vmatprep.subr.bf16.mxu0 0
    %331 = vmatpush2.bf16.msra.mxu0 0
    %332 = vmatprep.subr.bf16.mxu0 0
    %333 = vmatpush2.bf16.msra.mxu0 0
    %334 = vmatprep.mubr.bf16.mxu0 0
    %335 = vmatmul.mubr.bf16.gmra.mxu0 %v230
    %v336 = vpop.f32.mrf.mxu0
    %v337 = vadd.f32 %v252, %v336
    %v338 = vpop.f32.mrf.mxu0
    %v339 = vpop.f32.mrf.mxu0
    %v340 = vpop.f32.mrf.mxu0
    %341 = vdwg.mxu0
    %v342 = vtanh.pop %v337
    %343 = vst [vmem:[#allocation7] sm:$0xff] %v342
    // Predicated region
    $region38: #{ddpg_actor_forward.1} parent=1 // pred_check
      _
    $region39: #{ddpg_actor_forward.1} parent=1 // pred_check_branch
      %345 = sbr.rel (0) target = $region41
    $region40: #{ddpg_actor_forward.1} parent=1 // pred_region
      %s347 = ssub.s32 128, 128
      %348 = vsyncadd [#allocation4], %s347
      %s350 = sshll.u32 [#allocation7], 4
      %s351 = int_to_ptr.vmem [resolvable:$true] %s350
      %353 = dma.vmem_to_hbm [thread:$0]  %s351, 128, %s7, [#allocation4]
    $region41: #{ddpg_actor_forward.1} parent=1 // pred_fallthru
      _
    // Predicated region
    $region42: #{ddpg_actor_forward.1} parent=1 // pred_check
      _
    $region43: #{ddpg_actor_forward.1} parent=1 // pred_check_branch
      %355 = sbr.rel (0) target = $region45
    $region44: #{ddpg_actor_forward.1} parent=1 // pred_region
      %356 = dma.done [#allocation4], 128
    $region45: #{ddpg_actor_forward.1} parent=1 // pred_fallthru
      _
    %357 = vsyncpa [#allocation3], 1
    %358 = vsyncpa [#allocation6], 1
    %359 = vsyncpa [#allocation4], 1

</llo_original>
